<compile_context>
chip_gen: v5e
topology: v5e:2x2
jax: 0.10.0
libtpu: 0.0.40
codegen_flags: <defaults>
</compile_context>

<pallas_src>
import functools

import jax
import jax.numpy as jnp
from jax import lax
from jax.experimental import pallas as pl
from jax.experimental.pallas import tpu as pltpu


def _focal_loss_kernel(*refs, gamma, use_alpha, num_rows, tile_rows):
    if use_alpha:
        logits_ref, targets_ref, alpha_ref, out_ref = refs
    else:
        logits_ref, targets_ref, out_ref = refs
        alpha_ref = None

    i = pl.program_id(0)

    x = logits_ref[...].astype(jnp.float32)            # (TB, C) logits tile
    t = targets_ref[...]                                # (TB, 1) int32 labels
    TB, C = x.shape

    # Numerically stable log-sum-exp over the class (lane) axis.  The full
    # (TB, C) log_probs is never materialized: gather the shifted target
    # logit first, subtract the LSE on the (TB, 1) vector.
    m = jnp.max(x, axis=1, keepdims=True)               # (TB, 1)
    z = x - m                                           # (TB, C)
    lse = jnp.log(jnp.sum(jnp.exp(z), axis=1, keepdims=True))   # (TB, 1)

    class_iota = lax.broadcasted_iota(jnp.int32, (TB, C), 1)
    is_target = class_iota == t                          # (TB, C) one-hot mask
    z_t = jnp.sum(jnp.where(is_target, z, 0.0), axis=1, keepdims=True)
    logp_t = z_t - lse                                    # (TB, 1) log p_target

    # Focal weight on the (TB, 1) vector only; integer gamma -> VPU multiplies.
    p_t = jnp.exp(logp_t)
    w = 1.0 - p_t
    g = float(gamma)
    if g == 0.0:
        focal = jnp.ones_like(w)
    elif g.is_integer() and 0.0 < g <= 8.0:
        focal = w
        for _ in range(int(g) - 1):                       # pow -> multiplies
            focal = focal * w
    else:
        focal = w ** g

    row_loss = -focal * logp_t                            # (TB, 1)
    if use_alpha:
        alpha_row = alpha_ref[...].astype(jnp.float32)    # (1, C), loaded once
        alpha_t = jnp.sum(jnp.where(is_target, alpha_row, 0.0),
                          axis=1, keepdims=True)          # (TB, 1)
        row_loss = alpha_t * row_loss

    # Mask padded rows of the ragged last tile (their logits are undefined;
    # any NaN/Inf stays row-local and is dropped by the select below).
    row_iota = lax.broadcasted_iota(jnp.int32, (TB, 1), 0)
    valid = (i * tile_rows + row_iota) < num_rows
    row_loss = jnp.where(valid, row_loss, 0.0)

    # Per-block partial sum into this block's own aligned (8,128) slab:
    # no cross-step accumulator -> the batch grid axis is truly "parallel"
    # and can shard across both v7x TensorCores.  Wrapper sums [:, 0, 0].
    partial = jnp.sum(row_loss)
    out_ref[...] = jnp.broadcast_to(partial, out_ref.shape).astype(jnp.float32)


def _choose_tile_rows(B, C):
    """Adaptive row tile: ~4 MiB logits block per buffer; double-buffered
    (logits + lane-padded targets) total capped at ~24 MiB (v7x 64 MiB VMEM
    safe; also near the measured HBM-roofline sweet spot on v5e/v6e)."""
    target_block_bytes = 4 << 20
    max_pipeline_bytes = 24 << 20
    logits_row_bytes = 4 * C
    # A (TB, 1) int32 block is stored lane-padded as (TB, 128) -> 512 B/row.
    row_bytes = logits_row_bytes + 512
    tb = target_block_bytes // logits_row_bytes
    tb = min(tb, max_pipeline_bytes // (2 * row_bytes))
    tb = max(8, (int(tb) // 8) * 8)
    if tb >= B:
        return B          # full batch is always a legal full-dim block
    return tb


def focal_loss_multiclass(logits, targets, *, gamma=2.0, alpha=None,
                          reduction='mean', tile_rows=None):
    """Multi-class focal loss as a batch-tiled Pallas TPU kernel."""
    if reduction not in ('mean', 'sum'):
        # TODO(synk): reduction='none' needs a (B, C) VMEM output spec.
        raise NotImplementedError(f"reduction='{reduction}' not supported")

    B, C = logits.shape
    targets_2d = targets.reshape(B, 1).astype(jnp.int32)
    use_alpha = alpha is not None

    if tile_rows is None:
        TB = _choose_tile_rows(B, C)
    else:
        TB = B if int(tile_rows) >= B else max(8, (int(tile_rows) // 8) * 8)
    n_blocks = pl.cdiv(B, TB)

    in_specs = [
        pl.BlockSpec((TB, C), lambda i: (i, 0)),   # logits tile
        pl.BlockSpec((TB, 1), lambda i: (i, 0)),   # targets tile
    ]
    args = [logits, targets_2d]
    if use_alpha:
        alpha_arr = jnp.asarray(alpha, dtype=jnp.float32).reshape(1, C)
        in_specs.append(pl.BlockSpec((1, C), lambda i: (0, 0)))  # loaded once
        args.append(alpha_arr)

    kernel = functools.partial(
        _focal_loss_kernel, gamma=float(gamma), use_alpha=use_alpha,
        num_rows=B, tile_rows=TB)

    # VMEM budget from actual buffers: 2 pipeline stages per tiled input
    # (targets block counted at its lane-padded size), padded alpha, slack.
    logits_block = TB * C * 4
    targets_block = TB * 128 * 4
    alpha_block = (8 * ((C + 127) // 128) * 128 * 4) if use_alpha else 0
    needed = 2 * (logits_block + targets_block) + 2 * alpha_block + (4 << 20)
    vmem_limit = int(min(48 << 20, max(32 << 20, needed)))

    cost = pl.CostEstimate(
        flops=int(7 * B * C + 12 * B),
        transcendentals=int(B * C + 2 * B),
        bytes_accessed=int(logits.size * logits.dtype.itemsize
                           + B * 4 + (C * 4 if use_alpha else 0)
                           + n_blocks * 8 * 128 * 4),
    )

    partials = pl.pallas_call(
        kernel,
        out_shape=jax.ShapeDtypeStruct((n_blocks, 8, 128), jnp.float32),
        grid=(n_blocks,),
        in_specs=in_specs,
        out_specs=pl.BlockSpec((1, 8, 128), lambda i: (i, 0, 0)),
        compiler_params=pltpu.CompilerParams(
            dimension_semantics=("parallel",),
            vmem_limit_bytes=vmem_limit),
        cost_estimate=cost,
    )(*args)

    total = jnp.sum(partials[:, 0, 0])
    if reduction == 'mean':
        # Reference does loss.mean() over the (B, C) loss matrix.
        return total / jnp.float32(B * C)
    return total


def _reference_focal_loss(logits, targets, gamma=2.0, alpha=None,
                          reduction='mean'):
    """Pure-JAX reference mirroring the PyTorch multi_class_focal_loss."""
    logits = logits.astype(jnp.float32)
    probs = jax.nn.softmax(logits, axis=1)
    num_classes = logits.shape[1]
    one_hot = jax.nn.one_hot(targets, num_classes, dtype=jnp.float32)
    ce = -one_hot * jnp.log(probs)
    p_t = jnp.sum(probs * one_hot, axis=1)
    fw = (1.0 - p_t) ** gamma
    if alpha is not None:
        alpha = jnp.asarray(alpha, dtype=jnp.float32)
        alpha_t = alpha[targets]
        ce = alpha_t[:, None] * ce
    loss = fw[:, None] * ce
    if reduction == 'mean':
        return jnp.mean(loss)
    if reduction == 'sum':
        return jnp.sum(loss)
    return loss


if __name__ == "__main__":
    key = jax.random.PRNGKey(0)
    k1, k2, k3, k4, k5 = jax.random.split(key, 5)

    # Case 1: FocalLoss(gamma=2, alpha=None, reduction='mean',
    #                   task_type='multi-class', num_classes=C)
    B, C = 8, 16
    logits = jax.random.normal(k1, (B, C), dtype=jnp.float32)
    targets = jax.random.randint(k2, (B,), 0, C, dtype=jnp.int32)
    loss = focal_loss_multiclass(logits, targets, gamma=2.0, alpha=None,
                                 reduction='mean')
    loss = jax.block_until_ready(loss)
    ref = _reference_focal_loss(logits, targets, gamma=2.0, alpha=None,
                                reduction='mean')
    assert jnp.allclose(loss, ref, atol=1e-5, rtol=1e-5), (loss, ref)

    # Case 2: per-class alpha + explicit batch tiling with a ragged last tile.
    B2, C2 = 20, 16
    logits2 = jax.random.normal(k3, (B2, C2), dtype=jnp.float32)
    targets2 = jax.random.randint(k4, (B2,), 0, C2, dtype=jnp.int32)
    alpha2 = jax.random.uniform(k5, (C2,), minval=0.25, maxval=1.0,
                                dtype=jnp.float32)
    loss2 = focal_loss_multiclass(logits2, targets2, gamma=2.0, alpha=alpha2,
                                  reduction='mean', tile_rows=8)
    loss2 = jax.block_until_ready(loss2)
    ref2 = _reference_focal_loss(logits2, targets2, gamma=2.0, alpha=alpha2,
                                 reduction='mean')
    assert jnp.allclose(loss2, ref2, atol=1e-5, rtol=1e-5), (loss2, ref2)

    # Case 3: 'sum' reduction, adaptive tile (full batch fits one block).
    loss3 = focal_loss_multiclass(logits2, targets2, gamma=2.0, alpha=alpha2,
                                  reduction='sum')
    loss3 = jax.block_until_ready(loss3)
    ref3 = _reference_focal_loss(logits2, targets2, gamma=2.0, alpha=alpha2,
                                 reduction='sum')
    assert jnp.allclose(loss3, ref3, atol=1e-4, rtol=1e-5), (loss3, ref3)

    print("KERNEL_OK")
</pallas_src>

<mosaic_0001>
module attributes {stable_mosaic.version = 11 : i64} {
  func.func @_focal_loss_kernel(%arg0: i32, %arg1: memref<8x16xf32, #tpu.memory_space<vmem>>, %arg2: memref<8x1xi32, #tpu.memory_space<vmem>>, %arg3: memref<1x8x128xf32, #tpu.memory_space<vmem>>) attributes {dimension_semantics = [#tpu.dimension_semantics<parallel>], iteration_bounds = array<i64: 1>, scalar_prefetch = 0 : i64, scratch_operands = 0 : i64, tpu.core_type = #tpu.core_type<tc>, window_params = [{transform_indices = @transform_0, window_bounds = array<i64: 8, 16>}, {transform_indices = @transform_1, window_bounds = array<i64: 8, 1>}, {transform_indices = @transform_2, window_bounds = array<i64: 1, 8, 128>}]} {
    %c0 = arith.constant 0 : index
    %c0_0 = arith.constant 0 : index
    %0 = vector.load %arg1[%c0, %c0_0] : memref<8x16xf32, #tpu.memory_space<vmem>>, vector<8x16xf32>
    %c0_1 = arith.constant 0 : index
    %c0_2 = arith.constant 0 : index
    %1 = vector.load %arg2[%c0_1, %c0_2] : memref<8x1xi32, #tpu.memory_space<vmem>>, vector<8x1xi32>
    %cst = arith.constant dense<0xFF800000> : vector<8xf32>
    %2 = vector.multi_reduction <maximumf>, %0, %cst [1] : vector<8x16xf32> to vector<8xf32>
    %3 = vector.shape_cast %2 : vector<8xf32> to vector<8x1xf32>
    %4 = vector.broadcast %3 : vector<8x1xf32> to vector<8x16xf32>
    %5 = arith.subf %0, %4 : vector<8x16xf32>
    %6 = math.exp %5 : vector<8x16xf32>
    %cst_3 = arith.constant dense<0.000000e+00> : vector<8xf32>
    %7 = vector.multi_reduction <add>, %6, %cst_3 [1] : vector<8x16xf32> to vector<8xf32>
    %8 = vector.shape_cast %7 : vector<8xf32> to vector<8x1xf32>
    %9 = math.log %8 : vector<8x1xf32>
    %10 = tpu.iota {dimensions = array<i32: 1>} : vector<8x16xi32>
    %11 = vector.broadcast %1 : vector<8x1xi32> to vector<8x16xi32>
    %12 = arith.cmpi eq, %10, %11 : vector<8x16xi32>
    %cst_4 = arith.constant 0.000000e+00 : f32
    %13 = vector.broadcast %cst_4 : f32 to vector<8x16xf32>
    %14 = arith.select %12, %5, %13 : vector<8x16xi1>, vector<8x16xf32>
    %cst_5 = arith.constant dense<0.000000e+00> : vector<8xf32>
    %15 = vector.multi_reduction <add>, %14, %cst_5 [1] : vector<8x16xf32> to vector<8xf32>
    %16 = vector.shape_cast %15 : vector<8xf32> to vector<8x1xf32>
    %17 = arith.subf %16, %9 : vector<8x1xf32>
    %18 = math.exp %17 : vector<8x1xf32>
    %cst_6 = arith.constant 1.000000e+00 : f32
    %19 = vector.broadcast %cst_6 : f32 to vector<8x1xf32>
    %20 = arith.subf %19, %18 : vector<8x1xf32>
    %21 = arith.mulf %20, %20 : vector<8x1xf32>
    %cst_7 = arith.constant 0.000000e+00 : f32
    %22 = vector.broadcast %cst_7 : f32 to vector<8x1xf32>
    %23 = arith.subf %22, %21 : vector<8x1xf32>
    %24 = arith.mulf %23, %17 : vector<8x1xf32>
    %25 = tpu.iota {dimensions = array<i32: 0>} : vector<8x1xi32>
    %c8_i32 = arith.constant 8 : i32
    %26 = arith.muli %arg0, %c8_i32 : i32
    %27 = vector.broadcast %26 : i32 to vector<8x1xi32>
    %28 = arith.addi %27, %25 : vector<8x1xi32>
    %c8_i32_8 = arith.constant 8 : i32
    %29 = vector.broadcast %c8_i32_8 : i32 to vector<8x1xi32>
    %30 = arith.cmpi slt, %28, %29 : vector<8x1xi32>
    %cst_9 = arith.constant 0.000000e+00 : f32
    %31 = vector.broadcast %cst_9 : f32 to vector<8x1xf32>
    %32 = arith.select %30, %24, %31 : vector<8x1xi1>, vector<8x1xf32>
    %33 = vector.shape_cast %32 : vector<8x1xf32> to vector<1x8x1xf32>
    %cst_10 = arith.constant dense<0.000000e+00> : vector<1xf32>
    %34 = vector.multi_reduction <add>, %33, %cst_10 [1, 2] : vector<1x8x1xf32> to vector<1xf32>
    %35 = vector.shape_cast %34 : vector<1xf32> to vector<1x1x1xf32>
    %36 = vector.extract %35[0, 0, 0] : f32 from vector<1x1x1xf32>
    %37 = vector.broadcast %36 : f32 to vector<1x8x128xf32>
    %c0_11 = arith.constant 0 : index
    %c0_12 = arith.constant 0 : index
    %c0_13 = arith.constant 0 : index
    %38 = vector.load %arg3[%c0_11, %c0_12, %c0_13] : memref<1x8x128xf32, #tpu.memory_space<vmem>>, vector<1x8x128xf32>
    tpu.vector_store %arg3[%c0_11, %c0_12, %c0_13], %37 {strides = array<i32>} : memref<1x8x128xf32, #tpu.memory_space<vmem>>, vector<1x8x128xf32>,
    return
  }
  func.func @transform_0(%arg0: i32) -> (i32, i32) {
    %c0_i32 = arith.constant 0 : i32
    %c0_i32_0 = arith.constant 0 : i32
    return %arg0, %c0_i32 : i32, i32
  }
  func.func @transform_1(%arg0: i32) -> (i32, i32) {
    %c0_i32 = arith.constant 0 : i32
    %c0_i32_0 = arith.constant 0 : i32
    return %arg0, %c0_i32 : i32, i32
  }
  func.func @transform_2(%arg0: i32) -> (i32, i32, i32) {
    %c0_i32 = arith.constant 0 : i32
    %c0_i32_0 = arith.constant 0 : i32
    %c0_i32_1 = arith.constant 0 : i32
    return %arg0, %c0_i32, %c0_i32_0 : i32, i32, i32
  }
}

</mosaic_0001>

<llo_original>
// kernel: tpu_custom_call.1
$region0: #{tpu_custom_call.1}
  #allocation0 [shape = 'u32[]', space=smem, size = 0x4, offset = 0x4, fixed_abs, tag = 'smem constant byte address 0x4 - core index']
  #allocation1 [shape = 'u32[72,128]{1,0:T(1,128)}', space=vmem, size = 0x9000, scoped, tag = 'internal scratch']
  %s0 = inlined_call_operand.vmem [shape: f32[8,16], index: 0, kind: input, shape index: {}]
  %s1 = inlined_call_operand.vmem [shape: s32[8,1], index: 1, kind: input, shape index: {}]
  %s2 = inlined_call_operand.hbm [shape: f32[1,8,128], index: 2, kind: output, shape index: {}]
  %s3 = sld [smem:[#allocation0]]
  $region18: #{tpu_custom_call.1} parent=0
    _
  %s5 = ssub.s32 1, %s3
  %s6 = scalar_select 0, %s5, %s3
  $region1: #{tpu_custom_call.1} parent=0
    #allocation2 [shape = 'u8[4096]{0}', space=vmem, size = 0x1000, scoped, tag = 'output window, operand 0, single buffered']
    #allocation3 [shape = 's32[1]{0}', space=sflag, size = 0x4, scoped, tag = 'scoped memory for tpu_custom_call.1']
    %7 = vsyncpa [#allocation3], 0
    // Predicated region
    $region2: #{tpu_custom_call.1} parent=1 // pred_check
      _
    $region3: #{tpu_custom_call.1} parent=1 // pred_check_branch
      %9 = sbr.rel (0) target = $region5
    $region4: #{tpu_custom_call.1} parent=1 // pred_region
      _
    $region5: #{tpu_custom_call.1} parent=1 // pred_fallthru
      _
    // Predicated region
    $region6: #{tpu_custom_call.1} parent=1 // pred_check
      _
    $region7: #{tpu_custom_call.1} parent=1 // pred_check_branch
      %11 = sbr.rel (0) target = $region9
    $region8: #{tpu_custom_call.1} parent=1 // pred_region
      _
    $region9: #{tpu_custom_call.1} parent=1 // pred_fallthru
      _
    %v12 = vld [vmem:[%s0] sm:$0xff]
    %v13 = vld [vmem:[%s1] sm:$0xff]
    %vm14 = vcmask 130048
    %v15 = vsel %vm14, %v12, -inf
    %16 = vmax.xlane.f32.xlu0 %v15
    %v17 = vpop.xlane.xlu0 %16
    %v18 = vsub.f32 %v12, %v17
    %v19 = vmul.f32 %v18, 1.442695
    %v20 = vpow.pop %v19
    %v21 = vsel %vm14, %v20, 0.0
    %22 = vadd.xlane.f32.xlu0 %v21
    %v23 = vpop.xlane.xlu0 %22
    %v24 = vlog2.pop %v23
    %v25 = vmul.f32 %v24, 0.6931472
    %v26 = vlaneseq
    %v27 = vand.u32 %v26, 127
    %28 = vset.pattern.permute.xlu0 0
    %29 = vperm.xlu0 %28, %v13
    %v30 = vpop.permute.xlu0 %29
    %vm31 = vcmp.eq.s32.totalorder %v27, %v30
    %v32 = vsel %vm31, %v18, 0.0
    %v33 = vsel %vm14, %v32, 0.0
    %34 = vadd.xlane.f32.xlu0 %v33
    %v35 = vpop.xlane.xlu0 %34
    %v36 = vsub.f32 %v35, %v25
    %v37 = vmul.f32 %v36, 1.442695
    %v38 = vpow.pop %v37
    %v39 = vsub.f32 1.0, %v38
    %v40 = vmul.f32 %v39, %v39
    %v41 = vsub.f32 0.0, %v40
    %v42 = vmul.f32 %v41, %v36
    %v43 = vlaneseq
    %v44 = vshrl.u32 %v43, 7
    %s45 = smul.u32 0, 8
    %v46 = vstv %s45
    %v47 = vadd.s32 %v46, %v44
    %vm48 = vcmp.lt.s32.totalorder %v47, 8
    %v49 = vsel %vm48, %v42, 0.0
    %vm50 = vcmask 7168
    %v51 = vsel %vm50, %v49, 0.0
    %52 = vadd.xlane.f32.xlu0 %v51
    %v53 = vpop.xlane.xlu0 %52
    %v54 = vrot.slane %v53, 4
    %v55 = vadd.f32 %v53, %v54
    %v56 = vrot.slane %v55, 2
    %v57 = vadd.f32 %v55, %v56
    %v58 = vrot.slane %v57, 1
    %v59 = vadd.f32 %v57, %v58
    %s60 = vtos %v59
    %v61 = vstv %s60
    %62 = vst [vmem:[#allocation2] sm:$0xff] %v61
    // Predicated region
    $region10: #{tpu_custom_call.1} parent=1 // pred_check
      _
    $region11: #{tpu_custom_call.1} parent=1 // pred_check_branch
      %64 = sbr.rel (0) target = $region13
    $region12: #{tpu_custom_call.1} parent=1 // pred_region
      %66 = vsyncadd [#allocation3], 0
      %s68 = sshll.u32 [#allocation2], 4
      %s69 = int_to_ptr.vmem [resolvable:$true] %s68
      %s70 = sshll.u32 %s2, 4
      %s71 = int_to_ptr.hbm [resolvable:$true] %s70
      %73 = dma.vmem_to_hbm [thread:$0]  %s69, 128, %s71, [#allocation3]
    $region13: #{tpu_custom_call.1} parent=1 // pred_fallthru
      _
    // Predicated region
    $region14: #{tpu_custom_call.1} parent=1 // pred_check
      _
    $region15: #{tpu_custom_call.1} parent=1 // pred_check_branch
      %75 = sbr.rel (0) target = $region17
    $region16: #{tpu_custom_call.1} parent=1 // pred_region
      %77 = dma.done [#allocation3], 128
    $region17: #{tpu_custom_call.1} parent=1 // pred_fallthru
      _
    %78 = vsyncpa [#allocation3], 1

</llo_original>
